<compile_context>
chip_gen: v5e
topology: v5e:2x2
jax: 0.10.0
libtpu: 0.0.40
codegen_flags: <defaults>
</compile_context>

<pallas_src>
import jax
import jax.numpy as jnp
from jax.experimental import pallas as pl
from jax.experimental.pallas import tpu as pltpu


def _clamp(x):
    # ReLU followed by Hardtanh(-0.1, 0.1) == clamp(x, 0.0, 0.1)
    return jnp.minimum(jnp.maximum(x, 0.0), 0.1)


# ----------------------------------------------------------------------------
# Kernels
# ----------------------------------------------------------------------------
def _relu_hardtanh_kernel(x_ref, o_ref):
    o_ref[...] = _clamp(x_ref[...])


def _fused_clamp_split_kernel(x_ref, o_ref, s0_ref, s1_ref, s2_ref, s3_ref):
    # x_ref tile: (tr, 4, W).  Compute the clamp once; write the full result
    # ("concatenated" tensor) and the four unit slices straight from VMEM.
    y = _clamp(x_ref[...])
    o_ref[...] = y
    s0_ref[...] = y[:, 0:1, :]
    s1_ref[...] = y[:, 1:2, :]
    s2_ref[...] = y[:, 2:3, :]
    s3_ref[...] = y[:, 3:4, :]


# ----------------------------------------------------------------------------
# Generic elementwise wrapper (standalone clamp, lane-dense when possible)
# ----------------------------------------------------------------------------
_TARGET_BLOCK_ELEMS = 2048 * 128   # ~1 MiB of f32 per block (was 512 KiB)
_SMALL_ELEMS = 64 * 1024           # <= 256 KiB f32: single resident block, no grid


def _round_up(x, m):
    return ((x + m - 1) // m) * m


def relu_hardtanh(x):
    """Elementwise clamp(x, 0, 0.1) via a Pallas TPU kernel.

    Lane-dense (rows, 128) view when possible; ~1 MiB row tiles with a
    parallel 1-D grid (always >= 2 steps for large inputs so pipelining and
    v7x's two TensorCores are used).  Small inputs use one resident block.
    """
    orig_shape = x.shape
    total = x.size
    if total % 128 == 0:
        x2d = x.reshape(total // 128, 128)              # lane-dense view
    else:
        last = orig_shape[-1] if x.ndim >= 1 else 1
        x2d = x.reshape(-1, last)                       # fallback view (still tiled)
    rows, lanes = x2d.shape

    if total <= _SMALL_ELEMS:
        # Tiny case: one full-array VMEM block, no grid -> no pipeline overhead.
        out2d = pl.pallas_call(
            _relu_hardtanh_kernel,
            out_shape=jax.ShapeDtypeStruct(x2d.shape, x2d.dtype),
            in_specs=[pl.BlockSpec(memory_space=pltpu.MemorySpace.VMEM)],
            out_specs=pl.BlockSpec(memory_space=pltpu.MemorySpace.VMEM),
        )(x2d)
    else:
        # ~1 MiB blocks, 8-row aligned, capped at ceil(rows/2) so the grid has
        # at least 2 steps (keeps double-buffering + megacore sharding alive).
        tile_rows = max(8, (_TARGET_BLOCK_ELEMS // lanes) // 8 * 8)
        tile_rows = min(tile_rows, _round_up((rows + 1) // 2, 8))
        grid = (pl.cdiv(rows, tile_rows),)
        out2d = pl.pallas_call(
            _relu_hardtanh_kernel,
            out_shape=jax.ShapeDtypeStruct(x2d.shape, x2d.dtype),
            grid=grid,
            in_specs=[pl.BlockSpec((tile_rows, lanes), lambda i: (i, 0))],
            out_specs=pl.BlockSpec((tile_rows, lanes), lambda i: (i, 0)),
            compiler_params=pltpu.CompilerParams(
                dimension_semantics=("parallel",),
                vmem_limit_bytes=32 * 1024 * 1024,
            ),
        )(x2d)
    return out2d.reshape(orig_shape)


# ----------------------------------------------------------------------------
# Model forward: fused clamp + split (single pallas_call, 5 outputs)
# ----------------------------------------------------------------------------
def model_forward(x1):
    """Reproduces Model.forward semantics:
         v1 = Hardtanh(-0.1, 0.1)(ReLU(x1))
         split_tensors = split(v1, [1,1,1,1], dim=2)
         concatenated  = cat(split_tensors, dim=2)   # == v1 (identity)
         return (concatenated, split_tensors)
    All five outputs come out of ONE pallas_call; the splits are written from
    the clamped tile already resident in VMEM (no second HBM pass over v1).
    """
    B, C, S, W = x1.shape
    assert S == 4, "split([1, 1, 1, 1], dim=2) requires dim 2 == 4"
    R = B * C
    x3d = x1.reshape(R, S, W)

    # Row tile over the flattened (B*C) leading dim: ~1 MiB per input block,
    # and at least 2 grid steps whenever the input is big enough to pipeline.
    elems_per_row = S * W
    tr = max(1, _TARGET_BLOCK_ELEMS // elems_per_row)
    if R > tr:
        tr = min(tr, -(-R // 2))    # keep >= 2 grid steps
    tr = min(tr, R)
    grid = (pl.cdiv(R, tr),)

    full_spec = pl.BlockSpec((tr, S, W), lambda i: (i, 0, 0))
    slice_spec = pl.BlockSpec((tr, 1, W), lambda i: (i, 0, 0))

    full, s0, s1, s2, s3 = pl.pallas_call(
        _fused_clamp_split_kernel,
        out_shape=(
            jax.ShapeDtypeStruct((R, S, W), x1.dtype),
            jax.ShapeDtypeStruct((R, 1, W), x1.dtype),
            jax.ShapeDtypeStruct((R, 1, W), x1.dtype),
            jax.ShapeDtypeStruct((R, 1, W), x1.dtype),
            jax.ShapeDtypeStruct((R, 1, W), x1.dtype),
        ),
        grid=grid,
        in_specs=[full_spec],
        out_specs=(full_spec, slice_spec, slice_spec, slice_spec, slice_spec),
        compiler_params=pltpu.CompilerParams(
            dimension_semantics=("parallel",),
            vmem_limit_bytes=32 * 1024 * 1024,
        ),
    )(x3d)

    concatenated_tensor = full.reshape(B, C, S, W)
    split_tensors = tuple(s.reshape(B, C, 1, W) for s in (s0, s1, s2, s3))
    return concatenated_tensor, split_tensors


if __name__ == "__main__":
    key = jax.random.PRNGKey(0)
    # dim=2 must be 4 for split([1, 1, 1, 1], dim=2) to be valid.
    x1 = jax.random.normal(key, (1, 4, 4, 16), dtype=jnp.float32)

    concat, splits = model_forward(x1)
    jax.block_until_ready(concat)
    for s in splits:
        jax.block_until_ready(s)

    # Sanity checks against a pure-JAX reference.
    ref = jnp.clip(jnp.maximum(x1, 0.0), -0.1, 0.1)
    assert concat.shape == x1.shape
    assert jnp.allclose(concat, ref, atol=1e-6)
    assert all(s.shape == (1, 4, 1, 16) for s in splits)
    assert jnp.allclose(jnp.concatenate(splits, axis=2), ref, atol=1e-6)

    # Exercise the fused path with a multi-step grid (R = 8192 > one tile).
    xm = jax.random.normal(jax.random.PRNGKey(2), (16, 512, 4, 16), jnp.float32)
    cm, sm = model_forward(xm)
    jax.block_until_ready(cm)
    refm = jnp.clip(jnp.maximum(xm, 0.0), -0.1, 0.1)
    assert jnp.allclose(cm, refm, atol=1e-6)
    assert jnp.allclose(jnp.concatenate(sm, axis=2), refm, atol=1e-6)

    # Exercise both paths of the standalone elementwise kernel.
    xs = jax.random.normal(jax.random.PRNGKey(3), (1, 4, 4, 16), jnp.float32)
    ys = relu_hardtanh(xs)
    jax.block_until_ready(ys)
    assert jnp.allclose(ys, jnp.clip(jnp.maximum(xs, 0.0), -0.1, 0.1), atol=1e-6)

    xl = jax.random.normal(jax.random.PRNGKey(1), (1, 4, 512, 128), jnp.float32)
    yl = relu_hardtanh(xl)          # rows=2048 -> tile 1024 -> 2-step parallel grid
    jax.block_until_ready(yl)
    assert jnp.allclose(yl, jnp.clip(jnp.maximum(xl, 0.0), -0.1, 0.1), atol=1e-6)

    print("KERNEL_OK")
</pallas_src>

<mosaic_0001>
module attributes {stable_mosaic.version = 11 : i64} {
  func.func @_fused_clamp_split_kernel(%arg0: i32, %arg1: memref<4x4x16xf32, #tpu.memory_space<vmem>>, %arg2: memref<4x4x16xf32, #tpu.memory_space<vmem>>, %arg3: memref<4x1x16xf32, #tpu.memory_space<vmem>>, %arg4: memref<4x1x16xf32, #tpu.memory_space<vmem>>, %arg5: memref<4x1x16xf32, #tpu.memory_space<vmem>>, %arg6: memref<4x1x16xf32, #tpu.memory_space<vmem>>) attributes {dimension_semantics = [#tpu.dimension_semantics<parallel>], iteration_bounds = array<i64: 1>, scalar_prefetch = 0 : i64, scratch_operands = 0 : i64, tpu.core_type = #tpu.core_type<tc>, window_params = [{transform_indices = @transform_0, window_bounds = array<i64: 4, 4, 16>}, {transform_indices = @transform_1, window_bounds = array<i64: 4, 4, 16>}, {transform_indices = @transform_2, window_bounds = array<i64: 4, 1, 16>}, {transform_indices = @transform_3, window_bounds = array<i64: 4, 1, 16>}, {transform_indices = @transform_4, window_bounds = array<i64: 4, 1, 16>}, {transform_indices = @transform_5, window_bounds = array<i64: 4, 1, 16>}]} {
    %c0 = arith.constant 0 : index
    %c0_0 = arith.constant 0 : index
    %c0_1 = arith.constant 0 : index
    %0 = vector.load %arg1[%c0, %c0_0, %c0_1] : memref<4x4x16xf32, #tpu.memory_space<vmem>>, vector<4x4x16xf32>
    %cst = arith.constant 0.000000e+00 : f32
    %1 = vector.broadcast %cst : f32 to vector<4x4x16xf32>
    %2 = arith.maximumf %0, %1 : vector<4x4x16xf32>
    %cst_2 = arith.constant 1.000000e-01 : f32
    %3 = vector.broadcast %cst_2 : f32 to vector<4x4x16xf32>
    %4 = arith.minimumf %2, %3 : vector<4x4x16xf32>
    %c0_3 = arith.constant 0 : index
    %c0_4 = arith.constant 0 : index
    %c0_5 = arith.constant 0 : index
    %5 = vector.load %arg2[%c0_3, %c0_4, %c0_5] : memref<4x4x16xf32, #tpu.memory_space<vmem>>, vector<4x4x16xf32>
    tpu.vector_store %arg2[%c0_3, %c0_4, %c0_5], %4 {strides = array<i32>} : memref<4x4x16xf32, #tpu.memory_space<vmem>>, vector<4x4x16xf32>,
    %6 = vector.extract_strided_slice %4 {offsets = [0, 0, 0], sizes = [4, 1, 16], strides = [1, 1, 1]} : vector<4x4x16xf32> to vector<4x1x16xf32>
    %c0_6 = arith.constant 0 : index
    %c0_7 = arith.constant 0 : index
    %c0_8 = arith.constant 0 : index
    %7 = vector.load %arg3[%c0_6, %c0_7, %c0_8] : memref<4x1x16xf32, #tpu.memory_space<vmem>>, vector<4x1x16xf32>
    tpu.vector_store %arg3[%c0_6, %c0_7, %c0_8], %6 {strides = array<i32>} : memref<4x1x16xf32, #tpu.memory_space<vmem>>, vector<4x1x16xf32>,
    %8 = vector.extract_strided_slice %4 {offsets = [0, 1, 0], sizes = [4, 1, 16], strides = [1, 1, 1]} : vector<4x4x16xf32> to vector<4x1x16xf32>
    %c0_9 = arith.constant 0 : index
    %c0_10 = arith.constant 0 : index
    %c0_11 = arith.constant 0 : index
    %9 = vector.load %arg4[%c0_9, %c0_10, %c0_11] : memref<4x1x16xf32, #tpu.memory_space<vmem>>, vector<4x1x16xf32>
    tpu.vector_store %arg4[%c0_9, %c0_10, %c0_11], %8 {strides = array<i32>} : memref<4x1x16xf32, #tpu.memory_space<vmem>>, vector<4x1x16xf32>,
    %10 = vector.extract_strided_slice %4 {offsets = [0, 2, 0], sizes = [4, 1, 16], strides = [1, 1, 1]} : vector<4x4x16xf32> to vector<4x1x16xf32>
    %c0_12 = arith.constant 0 : index
    %c0_13 = arith.constant 0 : index
    %c0_14 = arith.constant 0 : index
    %11 = vector.load %arg5[%c0_12, %c0_13, %c0_14] : memref<4x1x16xf32, #tpu.memory_space<vmem>>, vector<4x1x16xf32>
    tpu.vector_store %arg5[%c0_12, %c0_13, %c0_14], %10 {strides = array<i32>} : memref<4x1x16xf32, #tpu.memory_space<vmem>>, vector<4x1x16xf32>,
    %12 = vector.extract_strided_slice %4 {offsets = [0, 3, 0], sizes = [4, 1, 16], strides = [1, 1, 1]} : vector<4x4x16xf32> to vector<4x1x16xf32>
    %c0_15 = arith.constant 0 : index
    %c0_16 = arith.constant 0 : index
    %c0_17 = arith.constant 0 : index
    %13 = vector.load %arg6[%c0_15, %c0_16, %c0_17] : memref<4x1x16xf32, #tpu.memory_space<vmem>>, vector<4x1x16xf32>
    tpu.vector_store %arg6[%c0_15, %c0_16, %c0_17], %12 {strides = array<i32>} : memref<4x1x16xf32, #tpu.memory_space<vmem>>, vector<4x1x16xf32>,
    return
  }
  func.func @transform_0(%arg0: i32) -> (i32, i32, i32) {
    %c0_i32 = arith.constant 0 : i32
    %c0_i32_0 = arith.constant 0 : i32
    %c0_i32_1 = arith.constant 0 : i32
    return %arg0, %c0_i32, %c0_i32_0 : i32, i32, i32
  }
  func.func @transform_1(%arg0: i32) -> (i32, i32, i32) {
    %c0_i32 = arith.constant 0 : i32
    %c0_i32_0 = arith.constant 0 : i32
    %c0_i32_1 = arith.constant 0 : i32
    return %arg0, %c0_i32, %c0_i32_0 : i32, i32, i32
  }
  func.func @transform_2(%arg0: i32) -> (i32, i32, i32) {
    %c0_i32 = arith.constant 0 : i32
    %c0_i32_0 = arith.constant 0 : i32
    %c0_i32_1 = arith.constant 0 : i32
    return %arg0, %c0_i32, %c0_i32_0 : i32, i32, i32
  }
  func.func @transform_3(%arg0: i32) -> (i32, i32, i32) {
    %c0_i32 = arith.constant 0 : i32
    %c0_i32_0 = arith.constant 0 : i32
    %c0_i32_1 = arith.constant 0 : i32
    return %arg0, %c0_i32, %c0_i32_0 : i32, i32, i32
  }
  func.func @transform_4(%arg0: i32) -> (i32, i32, i32) {
    %c0_i32 = arith.constant 0 : i32
    %c0_i32_0 = arith.constant 0 : i32
    %c0_i32_1 = arith.constant 0 : i32
    return %arg0, %c0_i32, %c0_i32_0 : i32, i32, i32
  }
  func.func @transform_5(%arg0: i32) -> (i32, i32, i32) {
    %c0_i32 = arith.constant 0 : i32
    %c0_i32_0 = arith.constant 0 : i32
    %c0_i32_1 = arith.constant 0 : i32
    return %arg0, %c0_i32, %c0_i32_0 : i32, i32, i32
  }
}

</mosaic_0001>

<llo_original>
// kernel: tpu_custom_call.1
$region0: #{tpu_custom_call.1}
  #allocation0 [shape = 'u32[]', space=smem, size = 0x4, offset = 0x4, fixed_abs, tag = 'smem constant byte address 0x4 - core index']
  #allocation1 [shape = 'u32[72,128]{1,0:T(1,128)}', space=vmem, size = 0x9000, scoped, tag = 'internal scratch']
  %s0 = inlined_call_operand.hbm [shape: f32[4,4,16], index: 0, kind: input, shape index: {}]
  %s1 = inlined_call_operand.hbm [shape: f32[4,4,16], index: 1, kind: output, shape index: {0}]
  %s2 = inlined_call_operand.hbm [shape: f32[4,1,16], index: 2, kind: output, shape index: {1}]
  %s3 = inlined_call_operand.hbm [shape: f32[4,1,16], index: 3, kind: output, shape index: {2}]
  %s4 = inlined_call_operand.hbm [shape: f32[4,1,16], index: 4, kind: output, shape index: {3}]
  %s5 = inlined_call_operand.hbm [shape: f32[4,1,16], index: 5, kind: output, shape index: {4}]
  %6 = xla_tuple %s1, %s2, %s3, %s4, %s5
  %s7 = sld [smem:[#allocation0]]
  $region50: #{tpu_custom_call.1} parent=0
    _
  %s9 = ssub.s32 1, %s7
  %s10 = scalar_select 0, %s9, %s7
  $region1: #{tpu_custom_call.1} parent=0
    #allocation2 [shape = 'u8[8192]{0}', space=vmem, size = 0x2000, scoped, tag = 'input window, operand 0, single buffered']
    #allocation3 [shape = 's32[1]{0}', space=sflag, size = 0x4, scoped, tag = 'scoped memory for tpu_custom_call.1']
    #allocation4 [shape = 's32[1]{0}', space=sflag, size = 0x4, scoped, tag = 'scoped memory for tpu_custom_call.1']
    #allocation5 [shape = 'u8[8192]{0}', space=vmem, size = 0x2000, scoped, tag = 'output window, operand 0, single buffered']
    #allocation6 [shape = 'u8[2048]{0}', space=vmem, size = 0x800, scoped, tag = 'output window, operand 1, single buffered']
    #allocation7 [shape = 's32[1]{0}', space=sflag, size = 0x4, scoped, tag = 'scoped memory for tpu_custom_call.1']
    #allocation8 [shape = 'u8[2048]{0}', space=vmem, size = 0x800, scoped, tag = 'output window, operand 2, single buffered']
    #allocation9 [shape = 'u8[2048]{0}', space=vmem, size = 0x800, scoped, tag = 'output window, operand 3, single buffered']
    #allocation10 [shape = 's32[1]{0}', space=sflag, size = 0x4, scoped, tag = 'scoped memory for tpu_custom_call.1']
    #allocation11 [shape = 'u8[2048]{0}', space=vmem, size = 0x800, scoped, tag = 'output window, operand 4, single buffered']
    %11 = vsyncpa [#allocation3], 0
    %12 = vsyncpa [#allocation4], 0
    %13 = vsyncpa [#allocation7], 0
    %14 = vsyncpa [#allocation10], 0
    // Predicated region
    $region2: #{tpu_custom_call.1} parent=1 // pred_check
      _
    $region3: #{tpu_custom_call.1} parent=1 // pred_check_branch
      %16 = sbr.rel (0) target = $region5
    $region4: #{tpu_custom_call.1} parent=1 // pred_region
      %18 = vsyncadd [#allocation3], 0
      %s19 = sshll.u32 %s0, 4
      %s20 = int_to_ptr.hbm [resolvable:$true] %s19
      %s21 = sshll.u32 [#allocation2], 4
      %s22 = int_to_ptr.vmem [resolvable:$true] %s21
      %27 = dma.hbm_to_vmem [thread:$0]  %s20, 256, %s22, [#allocation3], 64, 64, 4
    $region5: #{tpu_custom_call.1} parent=1 // pred_fallthru
      _
    // Predicated region
    $region6: #{tpu_custom_call.1} parent=1 // pred_check
      _
    $region7: #{tpu_custom_call.1} parent=1 // pred_check_branch
      %29 = sbr.rel (0) target = $region9
    $region8: #{tpu_custom_call.1} parent=1 // pred_region
      %31 = dma.done [#allocation3], 256
    $region9: #{tpu_custom_call.1} parent=1 // pred_fallthru
      _
    %v32 = vld [vmem:[#allocation2] sm:$0xf]
    %v33 = vld [vmem:[#allocation2 + $0x4] sm:$0xf]
    %v34 = vld [vmem:[#allocation2 + $0x8] sm:$0xf]
    %v35 = vld [vmem:[#allocation2 + $0xc] sm:$0xf]
    %v36 = vmax.f32 %v32, 0.0
    %v37 = vmax.f32 %v33, 0.0
    %v38 = vmax.f32 %v34, 0.0
    %v39 = vmax.f32 %v35, 0.0
    %v40 = vmin.f32 %v36, 0.1
    %v41 = vmin.f32 %v37, 0.1
    %v42 = vmin.f32 %v38, 0.1
    %v43 = vmin.f32 %v39, 0.1
    %vm44 = vcmask 125952
    %45 = vst.msk [vmem:[#allocation5] sm:$0xf] %vm44, %v40
    %46 = vst.msk [vmem:[#allocation5 + $0x4] sm:$0xf] %vm44, %v41
    %47 = vst.msk [vmem:[#allocation5 + $0x8] sm:$0xf] %vm44, %v42
    %48 = vst.msk [vmem:[#allocation5 + $0xc] sm:$0xf] %vm44, %v43
    %vm49 = vcmask 122880
    %50 = vst.msk [vmem:[#allocation6] sm:$0x1] %vm49, %v40
    %51 = vst.msk [vmem:[#allocation6 + $0x1] sm:$0x1] %vm49, %v41
    %52 = vst.msk [vmem:[#allocation6 + $0x2] sm:$0x1] %vm49, %v42
    %53 = vst.msk [vmem:[#allocation6 + $0x3] sm:$0x1] %vm49, %v43
    %vm54 = vcmask 123905
    %55 = vst.msk [vmem:[#allocation8 - $0x1] sm:$0x2] %vm54, %v40
    %56 = vst.msk [vmem:[#allocation8] sm:$0x2] %vm54, %v41
    %57 = vst.msk [vmem:[#allocation8 + $0x1] sm:$0x2] %vm54, %v42
    %58 = vst.msk [vmem:[#allocation8 + $0x2] sm:$0x2] %vm54, %v43
    %vm59 = vcmask 124930
    %60 = vst.msk [vmem:[#allocation9 - $0x2] sm:$0x4] %vm59, %v40
    %61 = vst.msk [vmem:[#allocation9 - $0x1] sm:$0x4] %vm59, %v41
    %62 = vst.msk [vmem:[#allocation9] sm:$0x4] %vm59, %v42
    %63 = vst.msk [vmem:[#allocation9 + $0x1] sm:$0x4] %vm59, %v43
    %vm64 = vcmask 125955
    %65 = vst.msk [vmem:[#allocation11 - $0x3] sm:$0x8] %vm64, %v40
    %66 = vst.msk [vmem:[#allocation11 - $0x2] sm:$0x8] %vm64, %v41
    %67 = vst.msk [vmem:[#allocation11 - $0x1] sm:$0x8] %vm64, %v42
    %68 = vst.msk [vmem:[#allocation11] sm:$0x8] %vm64, %v43
    // Predicated region
    $region10: #{tpu_custom_call.1} parent=1 // pred_check
      _
    $region11: #{tpu_custom_call.1} parent=1 // pred_check_branch
      %70 = sbr.rel (0) target = $region13
    $region12: #{tpu_custom_call.1} parent=1 // pred_region
      %72 = vsyncadd [#allocation4], 0
      %s73 = sshll.u32 [#allocation5], 4
      %s74 = int_to_ptr.vmem [resolvable:$true] %s73
      %s75 = sshll.u32 %s1, 4
      %s76 = int_to_ptr.hbm [resolvable:$true] %s75
      %81 = dma.vmem_to_hbm [thread:$0]  %s74, 256, %s76, [#allocation4], 64, 64, 4
    $region13: #{tpu_custom_call.1} parent=1 // pred_fallthru
      _
    // Predicated region
    $region14: #{tpu_custom_call.1} parent=1 // pred_check
      _
    $region15: #{tpu_custom_call.1} parent=1 // pred_check_branch
      %83 = sbr.rel (0) target = $region17
    $region16: #{tpu_custom_call.1} parent=1 // pred_region
      %85 = vsyncadd [#allocation7], 0
      %s86 = sshll.u32 [#allocation6], 4
      %s87 = int_to_ptr.vmem [resolvable:$true] %s86
      %s88 = sshll.u32 %s2, 4
      %s89 = int_to_ptr.hbm [resolvable:$true] %s88
      %94 = dma.vmem_to_hbm [thread:$0]  %s87, 64, %s89, [#allocation7], 16, 16, 1
    $region17: #{tpu_custom_call.1} parent=1 // pred_fallthru
      _
    // Predicated region
    $region18: #{tpu_custom_call.1} parent=1 // pred_check
      _
    $region19: #{tpu_custom_call.1} parent=1 // pred_check_branch
      %96 = sbr.rel (0) target = $region21
    $region20: #{tpu_custom_call.1} parent=1 // pred_region
      %98 = vsyncadd [#allocation7], 0
      %s99 = sshll.u32 [#allocation8], 4
      %s100 = int_to_ptr.vmem [resolvable:$true] %s99
      %s101 = sshll.u32 %s3, 4
      %s102 = int_to_ptr.hbm [resolvable:$true] %s101
      %107 = dma.vmem_to_hbm [thread:$0]  %s100, 64, %s102, [#allocation7], 16, 16, 1
    $region21: #{tpu_custom_call.1} parent=1 // pred_fallthru
      _
    // Predicated region
    $region22: #{tpu_custom_call.1} parent=1 // pred_check
      _
    $region23: #{tpu_custom_call.1} parent=1 // pred_check_branch
      %109 = sbr.rel (0) target = $region25
    $region24: #{tpu_custom_call.1} parent=1 // pred_region
      %111 = vsyncadd [#allocation10], 0
      %s112 = sshll.u32 [#allocation9], 4
      %s113 = int_to_ptr.vmem [resolvable:$true] %s112
      %s114 = sshll.u32 %s4, 4
      %s115 = int_to_ptr.hbm [resolvable:$true] %s114
      %120 = dma.vmem_to_hbm [thread:$0]  %s113, 64, %s115, [#allocation10], 16, 16, 1
    $region25: #{tpu_custom_call.1} parent=1 // pred_fallthru
      _
    // Predicated region
    $region26: #{tpu_custom_call.1} parent=1 // pred_check
      _
    $region27: #{tpu_custom_call.1} parent=1 // pred_check_branch
      %122 = sbr.rel (0) target = $region29
    $region28: #{tpu_custom_call.1} parent=1 // pred_region
      %124 = vsyncadd [#allocation10], 0
      %s125 = sshll.u32 [#allocation11], 4
      %s126 = int_to_ptr.vmem [resolvable:$true] %s125
      %s127 = sshll.u32 %s5, 4
      %s128 = int_to_ptr.hbm [resolvable:$true] %s127
      %133 = dma.vmem_to_hbm [thread:$0]  %s126, 64, %s128, [#allocation10], 16, 16, 1
    $region29: #{tpu_custom_call.1} parent=1 // pred_fallthru
      _
    // Predicated region
    $region30: #{tpu_custom_call.1} parent=1 // pred_check
      _
    $region31: #{tpu_custom_call.1} parent=1 // pred_check_branch
      %135 = sbr.rel (0) target = $region33
    $region32: #{tpu_custom_call.1} parent=1 // pred_region
      %137 = dma.done [#allocation4], 256
    $region33: #{tpu_custom_call.1} parent=1 // pred_fallthru
      _
    // Predicated region
    $region34: #{tpu_custom_call.1} parent=1 // pred_check
      _
    $region35: #{tpu_custom_call.1} parent=1 // pred_check_branch
      %139 = sbr.rel (0) target = $region37
    $region36: #{tpu_custom_call.1} parent=1 // pred_region
      %141 = dma.done [#allocation7], 64
    $region37: #{tpu_custom_call.1} parent=1 // pred_fallthru
      _
    // Predicated region
    $region38: #{tpu_custom_call.1} parent=1 // pred_check
      _
    $region39: #{tpu_custom_call.1} parent=1 // pred_check_branch
      %143 = sbr.rel (0) target = $region41
    $region40: #{tpu_custom_call.1} parent=1 // pred_region
      %145 = dma.done [#allocation7], 64
    $region41: #{tpu_custom_call.1} parent=1 // pred_fallthru
      _
    // Predicated region
    $region42: #{tpu_custom_call.1} parent=1 // pred_check
      _
    $region43: #{tpu_custom_call.1} parent=1 // pred_check_branch
      %147 = sbr.rel (0) target = $region45
    $region44: #{tpu_custom_call.1} parent=1 // pred_region
      %149 = dma.done [#allocation10], 64
    $region45: #{tpu_custom_call.1} parent=1 // pred_fallthru
      _
    // Predicated region
    $region46: #{tpu_custom_call.1} parent=1 // pred_check
      _
    $region47: #{tpu_custom_call.1} parent=1 // pred_check_branch
      %151 = sbr.rel (0) target = $region49
    $region48: #{tpu_custom_call.1} parent=1 // pred_region
      %153 = dma.done [#allocation10], 64
    $region49: #{tpu_custom_call.1} parent=1 // pred_fallthru
      _
    %154 = vsyncpa [#allocation3], 1
    %155 = vsyncpa [#allocation4], 1
    %156 = vsyncpa [#allocation7], 1
    %157 = vsyncpa [#allocation10], 1

</llo_original>
